<compile_context>
chip_gen: v5e
topology: v5e:2x2
jax: 0.10.0
libtpu: 0.0.40
codegen_flags: <defaults>
</compile_context>

<pallas_src>
import jax
import jax.numpy as jnp
import numpy as np
from jax.experimental import pallas as pl
from jax.experimental.pallas import tpu as pltpu


def _round_up(v, m):
    return ((v + m - 1) // m) * m


def _pick_node_tiles(n):
    """Pick (n_pad, tm, tk): lane/sublane-dense node padding, tiles divide n_pad."""
    if n <= 128:
        n_pad = _round_up(n, 16)                 # bf16 sublane packing
        return n_pad, n_pad, n_pad
    n_pad = _round_up(n, 128)
    blocks = n_pad // 128
    tm_b = max(d for d in range(1, min(4, blocks) + 1) if blocks % d == 0)
    if tm_b == 1 and n_pad > 2048:               # awkward (prime-ish) block count
        n_pad = _round_up(n, 512)
        blocks = n_pad // 128
        tm_b = max(d for d in range(1, min(4, blocks) + 1) if blocks % d == 0)
    tk_b = max(d for d in range(1, min(32, blocks) + 1) if blocks % d == 0)
    return n_pad, 128 * tm_b, 128 * tk_b


def _vmem_capacity_bytes():
    try:
        return int(pltpu.get_tpu_info().vmem_capacity_bytes)
    except Exception:
        return 64 * 2**20                        # conservative: v7x per-TC VMEM


def _gated_rgcn_kernel(adj_ref, y_ref, xd_ref, wroot_ref, bias_ref,
                       wattu_ref, wattx_ref, batt_ref, h_ref, acc_ref):
    r = pl.program_id(1)
    k = pl.program_id(2)
    nr = pl.num_programs(1)
    nk = pl.num_programs(2)

    @pl.when((r == 0) & (k == 0))
    def _():
        # Fold the root transform + bias into the accumulator init so this
        # small CxC matmul overlaps the first adjacency-tile DMA.
        acc_ref[...] = (
            jnp.dot(xd_ref[...].astype(wroot_ref.dtype), wroot_ref[...],
                    preferred_element_type=jnp.float32)
            + bias_ref[...])

    # Relation message path: acc += adj[r, i-tile, k-tile] @ Y[r, k-tile].
    # Y = X @ W_rel was precomputed in the wrapper -> no redundant MXU work.
    acc_ref[...] += jnp.dot(adj_ref[0], y_ref[0],
                            preferred_element_type=jnp.float32)

    @pl.when((r == nr - 1) & (k == nk - 1))
    def _():
        u0 = acc_ref[...]
        x = xd_ref[...]
        # attention gate: sigmoid([u0, x] @ W_att^T + b_att)
        # TODO(synk): if this epilogue ever shows in profiles, fuse the two
        # lane reductions into one MXU dot against a stacked (C_pad, 128)
        # [w_att_u; w_att_x] weight (MXU is idle at this point).
        att = (jnp.sum(u0 * wattu_ref[...], axis=-1, keepdims=True)
               + jnp.sum(x * wattx_ref[...], axis=-1, keepdims=True)
               + batt_ref[0, 0])
        a = jax.nn.sigmoid(att)
        h_ref[...] = (jnp.tanh(u0) * a + x * (1.0 - a)).astype(h_ref.dtype)


def gated_rgcn_pallas(x, adj, w_rel, w_root, bias, w_att_u, w_att_x, b_att,
                      matmul_dtype=jnp.bfloat16):
    """x: [N, C]; adj: [R, N, N] row-normalized per relation; params f32."""
    N, C = x.shape
    R = adj.shape[0]
    f32 = jnp.float32
    out_dtype = x.dtype

    # ---- padding / tile selection -----------------------------------------
    C_pad = _round_up(max(C, 128), 128)          # lane-dense channel axis
    N_pad, TM, TK = _pick_node_tiles(N)
    pn, pc = N_pad - N, C_pad - C

    # Destination-side x (f32: root transform + residual gate).
    x_f32 = x.astype(f32)
    if pn or pc:
        x_f32 = jnp.pad(x_f32, ((0, pn), (0, pc)))
    x_mm = x_f32.astype(matmul_dtype)

    # Adjacency: cast to the matmul dtype BEFORE padding (single cheap pass),
    # skip the pad when already aligned.
    # TODO(synk): encode as int8 edge counts (v5e/v6e) / fp8-e4m3 counts (v7x)
    # with in-kernel 1/deg scaling to halve the dominant R*N^2 HBM stream; and
    # ultimately a CSR / padded-neighbor-gather path (scalar prefetch) so
    # traffic scales with E instead of R*N^2 for sparse graphs.
    adj_p = adj if adj.dtype == matmul_dtype else adj.astype(matmul_dtype)
    if pn:
        adj_p = jnp.pad(adj_p, ((0, 0), (0, pn), (0, pn)))

    # Precompute relation messages Y[r] = X @ W_rel[r] (tiny prologue in XLA).
    wrel_mm = w_rel.astype(matmul_dtype)
    if pc:
        wrel_mm = jnp.pad(wrel_mm, ((0, 0), (0, pc), (0, pc)))
    y_p = jnp.einsum('nc,rcd->rnd', x_mm, wrel_mm,
                     preferred_element_type=f32).astype(matmul_dtype)

    wroot_p = w_root.astype(matmul_dtype)
    if pc:
        wroot_p = jnp.pad(wroot_p, ((0, pc), (0, pc)))
    bias_p = jnp.pad(bias.astype(f32), ((0, 0), (0, pc))) if pc else bias.astype(f32)
    wattu_p = jnp.pad(w_att_u.astype(f32), ((0, 0), (0, pc))) if pc else w_att_u.astype(f32)
    wattx_p = jnp.pad(w_att_x.astype(f32), ((0, 0), (0, pc))) if pc else w_att_x.astype(f32)
    batt_p = b_att.astype(f32)

    grid = (N_pad // TM, R, N_pad // TK)
    mm_bytes = np.dtype(matmul_dtype).itemsize
    out_bytes = np.dtype(out_dtype).itemsize

    # Scoped-VMEM budget from the actual double-buffered tile sizes.
    vmem_need = (2 * TM * TK * mm_bytes          # adj tiles (double-buffered)
                 + 2 * TK * C_pad * mm_bytes     # Y tiles
                 + 2 * TM * C_pad * 4            # x destination tiles (f32)
                 + 2 * C_pad * C_pad * mm_bytes  # W_root
                 + TM * C_pad * 4                # f32 accumulator scratch
                 + 2 * TM * C_pad * out_bytes    # output tiles
                 + 8 * C_pad * 4)                # bias / attention vectors
    vmem_limit = int(min(max(32 * 2**20, 2 * vmem_need),
                         (3 * _vmem_capacity_bytes()) // 4))

    cost = pl.CostEstimate(
        flops=int(2 * R * N_pad * N_pad * C_pad + 2 * N_pad * C_pad * C_pad),
        transcendentals=int(N_pad * (C_pad + 2)),
        bytes_accessed=int(R * N_pad * N_pad * mm_bytes                    # adjacency
                           + (N_pad // TM) * R * N_pad * C_pad * mm_bytes  # Y re-stream
                           + N_pad * C_pad * (4 + out_bytes)               # x dest + out
                           + (C_pad * C_pad + 4 * C_pad) * mm_bytes),
    )

    out = pl.pallas_call(
        _gated_rgcn_kernel,
        out_shape=jax.ShapeDtypeStruct((N_pad, C_pad), out_dtype),
        grid_spec=pltpu.PrefetchScalarGridSpec(
            num_scalar_prefetch=0,
            grid=grid,
            in_specs=[
                # adjacency streamed in (TM, TK) tiles, one relation at a time
                pl.BlockSpec((1, TM, TK), lambda i, r, k: (r, i, k)),
                # precomputed relation messages Y[r] (K-tiled)
                pl.BlockSpec((1, TK, C_pad), lambda i, r, k: (r, k, 0)),
                # x destination-row tile (f32) for root transform + gating
                pl.BlockSpec((TM, C_pad), lambda i, r, k: (i, 0)),
                pl.BlockSpec((C_pad, C_pad), lambda i, r, k: (0, 0)),   # W_root
                pl.BlockSpec((1, C_pad), lambda i, r, k: (0, 0)),       # bias
                pl.BlockSpec((1, C_pad), lambda i, r, k: (0, 0)),       # W_att (u0 half)
                pl.BlockSpec((1, C_pad), lambda i, r, k: (0, 0)),       # W_att (x half)
                pl.BlockSpec(memory_space=pltpu.MemorySpace.SMEM),      # b_att scalar
            ],
            out_specs=pl.BlockSpec((TM, C_pad), lambda i, r, k: (i, 0)),
            scratch_shapes=[pltpu.VMEM((TM, C_pad), jnp.float32)],
        ),
        # TODO(synk): on v7x verify in the trace that the i axis actually
        # shards across both TensorCores; if not, switch axis 0 to
        # pltpu.CORE_PARALLEL (the per-i accumulator structure is core-safe).
        compiler_params=pltpu.CompilerParams(
            dimension_semantics=("parallel", "arbitrary", "arbitrary"),
            vmem_limit_bytes=vmem_limit),
        cost_estimate=cost,
    )(adj_p, y_p, x_f32, wroot_p, bias_p, wattu_p, wattx_p, batt_p)

    return out[:N, :C]


def build_normalized_adjacency(edge_index, edge_type, num_nodes, num_relations,
                               dtype=jnp.float32):
    """adj[r, i, j] = (# edges j->i of type r) / deg_r(i); zero-degree rows stay 0."""
    src = edge_index[0]
    dst = edge_index[1]
    counts = jnp.zeros((num_relations, num_nodes, num_nodes), jnp.float32)
    counts = counts.at[edge_type, dst, src].add(1.0)
    deg = counts.sum(axis=-1, keepdims=True)
    return jnp.where(deg > 0, counts / jnp.maximum(deg, 1.0), 0.0).astype(dtype)


def xavier_uniform(key, shape, gain=1.0):
    fan_in, fan_out = shape[-1], shape[-2]
    bound = gain * np.sqrt(6.0 / (fan_in + fan_out))
    return jax.random.uniform(key, shape, jnp.float32, -bound, bound)


def reference_forward(x, adj, w_rel, w_root, bias, w_att_u, w_att_x, b_att,
                      matmul_dtype=jnp.float32):
    """Pure-JAX reference. `matmul_dtype` simulates the kernel's MXU input cast
    (accumulation stays f32), so the bf16 fast path can be checked tightly."""
    f32 = jnp.float32
    q = lambda v: v.astype(matmul_dtype).astype(f32)
    xq, adjq, wrq, wrootq = q(x), q(adj), q(w_rel), q(w_root)
    u0 = xq @ wrootq + bias
    y = q(jnp.einsum('nc,rcd->rnd', xq, wrq))
    u0 = u0 + jnp.einsum('rij,rjd->id', adjq, y)
    att = ((u0 * w_att_u).sum(-1, keepdims=True)
           + (x * w_att_x).sum(-1, keepdims=True) + b_att[0, 0])
    a = jax.nn.sigmoid(att)
    return jnp.tanh(u0) * a + x * (1.0 - a)


if __name__ == "__main__":
    # small synthetic problem: out_channels=32, 8 nodes, 3 relations, 16 edges
    N, C, R, E = 8, 32, 3, 16

    key = jax.random.PRNGKey(0)
    k_x, k_src, k_dst, k_et, k_wr, k_root, k_au, k_ax = jax.random.split(key, 8)

    x = jax.random.normal(k_x, (N, C), jnp.float32)
    edge_index = jnp.stack([
        jax.random.randint(k_src, (E,), 0, N),
        jax.random.randint(k_dst, (E,), 0, N),
    ])
    edge_type = jax.random.randint(k_et, (E,), 0, R)

    # deterministic parameter init (glorot for RGCN weights, zero biases,
    # xavier_uniform(gain('sigmoid')=1.0) for attention, zero attention bias)
    w_rel = xavier_uniform(k_wr, (R, C, C))
    w_root = xavier_uniform(k_root, (C, C))
    bias = jnp.zeros((1, C), jnp.float32)
    w_att_u = xavier_uniform(k_au, (1, C)) * np.sqrt((C + 1) / (2 * C + 1))
    w_att_x = xavier_uniform(k_ax, (1, C)) * np.sqrt((C + 1) / (2 * C + 1))
    b_att = jnp.zeros((1, 1), jnp.float32)

    adj = build_normalized_adjacency(edge_index, edge_type, N, R)
    args = (x, adj, w_rel, w_root, bias, w_att_u, w_att_x, b_att)

    # exact path (f32 MXU inputs) -> tight tolerance
    out_f32 = jax.block_until_ready(
        gated_rgcn_pallas(*args, matmul_dtype=jnp.float32))
    ref_f32 = reference_forward(*args, matmul_dtype=jnp.float32)
    np.testing.assert_allclose(np.asarray(out_f32), np.asarray(ref_f32),
                               rtol=1e-5, atol=1e-5)

    # fast path (bf16 MXU inputs, f32 accumulation) -> check vs bf16-rounded ref
    out_bf16 = jax.block_until_ready(
        gated_rgcn_pallas(*args, matmul_dtype=jnp.bfloat16))
    ref_bf16 = reference_forward(*args, matmul_dtype=jnp.bfloat16)
    np.testing.assert_allclose(np.asarray(out_bf16), np.asarray(ref_bf16),
                               rtol=2e-3, atol=2e-3)

    print("KERNEL_OK")
</pallas_src>

<mosaic_0001>
module attributes {stable_mosaic.version = 11 : i64} {
  func.func @_gated_rgcn_kernel(%arg0: i32, %arg1: i32, %arg2: i32, %arg3: memref<1x16x16xf32, #tpu.memory_space<vmem>>, %arg4: memref<1x16x128xf32, #tpu.memory_space<vmem>>, %arg5: memref<16x128xf32, #tpu.memory_space<vmem>>, %arg6: memref<128x128xf32, #tpu.memory_space<vmem>>, %arg7: memref<1x128xf32, #tpu.memory_space<vmem>>, %arg8: memref<1x128xf32, #tpu.memory_space<vmem>>, %arg9: memref<1x128xf32, #tpu.memory_space<vmem>>, %arg10: memref<1x1xf32, #tpu.memory_space<smem>>, %arg11: memref<16x128xf32, #tpu.memory_space<vmem>>, %arg12: memref<16x128xf32, #tpu.memory_space<vmem>>) attributes {dimension_semantics = [#tpu.dimension_semantics<parallel>, #tpu.dimension_semantics<arbitrary>, #tpu.dimension_semantics<arbitrary>], iteration_bounds = array<i64: 1, 3, 1>, scalar_prefetch = 0 : i64, scratch_operands = 1 : i64, tpu.core_type = #tpu.core_type<tc>, window_params = [{transform_indices = @transform_0, window_bounds = array<i64: 1, 16, 16>}, {transform_indices = @transform_1, window_bounds = array<i64: 1, 16, 128>}, {transform_indices = @transform_2, window_bounds = array<i64: 16, 128>}, {pipeline_mode = #tpu.pipeline_mode<synchronous>, transform_indices = @transform_3, window_bounds = array<i64: 128, 128>}, {pipeline_mode = #tpu.pipeline_mode<synchronous>, transform_indices = @transform_4, window_bounds = array<i64: 1, 128>}, {pipeline_mode = #tpu.pipeline_mode<synchronous>, transform_indices = @transform_5, window_bounds = array<i64: 1, 128>}, {pipeline_mode = #tpu.pipeline_mode<synchronous>, transform_indices = @transform_6, window_bounds = array<i64: 1, 128>}, {transform_indices = @transform_7, window_bounds = array<i64: 1, 1>}, {transform_indices = @transform_8, window_bounds = array<i64: 16, 128>}]} {
    %c0_i32 = arith.constant 0 : i32
    %0 = arith.cmpi eq, %arg1, %c0_i32 : i32
    %c0_i32_0 = arith.constant 0 : i32
    %1 = arith.cmpi eq, %arg2, %c0_i32_0 : i32
    %2 = arith.andi %0, %1 : i1
    %3 = arith.extui %2 : i1 to i32
    %c0_i32_1 = arith.constant 0 : i32
    %4 = arith.cmpi ne, %3, %c0_i32_1 : i32
    scf.if %4 {
      %c0_13 = arith.constant 0 : index
      %c0_14 = arith.constant 0 : index
      %18 = vector.load %arg5[%c0_13, %c0_14] : memref<16x128xf32, #tpu.memory_space<vmem>>, vector<16x128xf32>
      %c0_15 = arith.constant 0 : index
      %c0_16 = arith.constant 0 : index
      %19 = vector.load %arg6[%c0_15, %c0_16] : memref<128x128xf32, #tpu.memory_space<vmem>>, vector<128x128xf32>
      %cst_17 = arith.constant dense<0.000000e+00> : vector<16x128xf32>
      %20 = tpu.matmul %18, %19, %cst_17 {dimension_numbers = #tpu.dot_dimension_numbers<[1], [0], [0], [1], [0, 0, 1, 1], [], []>} : vector<16x128xf32>, vector<128x128xf32>, vector<16x128xf32> -> vector<16x128xf32>
      %c0_18 = arith.constant 0 : index
      %c0_19 = arith.constant 0 : index
      %21 = vector.load %arg7[%c0_18, %c0_19] : memref<1x128xf32, #tpu.memory_space<vmem>>, vector<1x128xf32>
      %22 = vector.broadcast %21 : vector<1x128xf32> to vector<16x128xf32>
      %23 = arith.addf %20, %22 : vector<16x128xf32>
      %c0_20 = arith.constant 0 : index
      %c0_21 = arith.constant 0 : index
      %24 = vector.load %arg12[%c0_20, %c0_21] : memref<16x128xf32, #tpu.memory_space<vmem>>, vector<16x128xf32>
      tpu.vector_store %arg12[%c0_20, %c0_21], %23 {strides = array<i32>} : memref<16x128xf32, #tpu.memory_space<vmem>>, vector<16x128xf32>,
    } else {
    }
    %c0 = arith.constant 0 : index
    %c0_2 = arith.constant 0 : index
    %5 = vector.load %arg12[%c0, %c0_2] : memref<16x128xf32, #tpu.memory_space<vmem>>, vector<16x128xf32>
    %c0_3 = arith.constant 0 : index
    %c0_4 = arith.constant 0 : index
    %c0_5 = arith.constant 0 : index
    %6 = vector.load %arg3[%c0_3, %c0_4, %c0_5] : memref<1x16x16xf32, #tpu.memory_space<vmem>>, vector<1x16x16xf32>
    %7 = vector.shape_cast %6 : vector<1x16x16xf32> to vector<16x16xf32>
    %c0_6 = arith.constant 0 : index
    %c0_7 = arith.constant 0 : index
    %c0_8 = arith.constant 0 : index
    %8 = vector.load %arg4[%c0_6, %c0_7, %c0_8] : memref<1x16x128xf32, #tpu.memory_space<vmem>>, vector<1x16x128xf32>
    %9 = vector.shape_cast %8 : vector<1x16x128xf32> to vector<16x128xf32>
    %cst = arith.constant dense<0.000000e+00> : vector<16x128xf32>
    %10 = tpu.matmul %7, %9, %cst {dimension_numbers = #tpu.dot_dimension_numbers<[1], [0], [0], [1], [0, 0, 1, 1], [], []>} : vector<16x16xf32>, vector<16x128xf32>, vector<16x128xf32> -> vector<16x128xf32>
    %11 = arith.addf %5, %10 : vector<16x128xf32>
    %c0_9 = arith.constant 0 : index
    %c0_10 = arith.constant 0 : index
    %12 = vector.load %arg12[%c0_9, %c0_10] : memref<16x128xf32, #tpu.memory_space<vmem>>, vector<16x128xf32>
    tpu.vector_store %arg12[%c0_9, %c0_10], %11 {strides = array<i32>} : memref<16x128xf32, #tpu.memory_space<vmem>>, vector<16x128xf32>,
    %c2_i32 = arith.constant 2 : i32
    %13 = arith.cmpi eq, %arg1, %c2_i32 : i32
    %c0_i32_11 = arith.constant 0 : i32
    %14 = arith.cmpi eq, %arg2, %c0_i32_11 : i32
    %15 = arith.andi %13, %14 : i1
    %16 = arith.extui %15 : i1 to i32
    %c0_i32_12 = arith.constant 0 : i32
    %17 = arith.cmpi ne, %16, %c0_i32_12 : i32
    scf.if %17 {
      %c0_13 = arith.constant 0 : index
      %c0_14 = arith.constant 0 : index
      %18 = vector.load %arg12[%c0_13, %c0_14] : memref<16x128xf32, #tpu.memory_space<vmem>>, vector<16x128xf32>
      %c0_15 = arith.constant 0 : index
      %c0_16 = arith.constant 0 : index
      %19 = vector.load %arg5[%c0_15, %c0_16] : memref<16x128xf32, #tpu.memory_space<vmem>>, vector<16x128xf32>
      %c0_17 = arith.constant 0 : index
      %c0_18 = arith.constant 0 : index
      %20 = vector.load %arg8[%c0_17, %c0_18] : memref<1x128xf32, #tpu.memory_space<vmem>>, vector<1x128xf32>
      %21 = vector.broadcast %20 : vector<1x128xf32> to vector<16x128xf32>
      %22 = arith.mulf %18, %21 : vector<16x128xf32>
      %cst_19 = arith.constant dense<0.000000e+00> : vector<16xf32>
      %23 = vector.multi_reduction <add>, %22, %cst_19 [1] : vector<16x128xf32> to vector<16xf32>
      %24 = vector.shape_cast %23 : vector<16xf32> to vector<16x1xf32>
      %c0_20 = arith.constant 0 : index
      %c0_21 = arith.constant 0 : index
      %25 = vector.load %arg9[%c0_20, %c0_21] : memref<1x128xf32, #tpu.memory_space<vmem>>, vector<1x128xf32>
      %26 = vector.broadcast %25 : vector<1x128xf32> to vector<16x128xf32>
      %27 = arith.mulf %19, %26 : vector<16x128xf32>
      %cst_22 = arith.constant dense<0.000000e+00> : vector<16xf32>
      %28 = vector.multi_reduction <add>, %27, %cst_22 [1] : vector<16x128xf32> to vector<16xf32>
      %29 = vector.shape_cast %28 : vector<16xf32> to vector<16x1xf32>
      %30 = arith.addf %24, %29 : vector<16x1xf32>
      %c0_23 = arith.constant 0 : index
      %c0_24 = arith.constant 0 : index
      %31 = memref.load %arg10[%c0_23, %c0_24] : memref<1x1xf32, #tpu.memory_space<smem>>
      %32 = vector.broadcast %31 : f32 to vector<16x1xf32>
      %33 = arith.addf %30, %32 : vector<16x1xf32>
      %34 = arith.negf %33 : vector<16x1xf32>
      %35 = math.exp %34 : vector<16x1xf32>
      %cst_25 = arith.constant 1.000000e+00 : f32
      %36 = vector.broadcast %cst_25 : f32 to vector<16x1xf32>
      %37 = arith.addf %36, %35 : vector<16x1xf32>
      %38 = arith.divf %36, %37 : vector<16x1xf32>
      %39 = math.tanh %18 : vector<16x128xf32>
      %40 = vector.broadcast %38 : vector<16x1xf32> to vector<16x128xf32>
      %41 = arith.mulf %39, %40 : vector<16x128xf32>
      %cst_26 = arith.constant 1.000000e+00 : f32
      %42 = vector.broadcast %cst_26 : f32 to vector<16x1xf32>
      %43 = arith.subf %42, %38 : vector<16x1xf32>
      %44 = vector.broadcast %43 : vector<16x1xf32> to vector<16x128xf32>
      %45 = arith.mulf %19, %44 : vector<16x128xf32>
      %46 = arith.addf %41, %45 : vector<16x128xf32>
      %c0_27 = arith.constant 0 : index
      %c0_28 = arith.constant 0 : index
      %47 = vector.load %arg11[%c0_27, %c0_28] : memref<16x128xf32, #tpu.memory_space<vmem>>, vector<16x128xf32>
      tpu.vector_store %arg11[%c0_27, %c0_28], %46 {strides = array<i32>} : memref<16x128xf32, #tpu.memory_space<vmem>>, vector<16x128xf32>,
    } else {
    }
    return
  }
  func.func @transform_0(%arg0: i32, %arg1: i32, %arg2: i32) -> (i32, i32, i32) {
    %c0_i32 = arith.constant 0 : i32
    return %arg1, %arg0, %arg2 : i32, i32, i32
  }
  func.func @transform_1(%arg0: i32, %arg1: i32, %arg2: i32) -> (i32, i32, i32) {
    %c0_i32 = arith.constant 0 : i32
    %c0_i32_0 = arith.constant 0 : i32
    return %arg1, %arg2, %c0_i32 : i32, i32, i32
  }
  func.func @transform_2(%arg0: i32, %arg1: i32, %arg2: i32) -> (i32, i32) {
    %c0_i32 = arith.constant 0 : i32
    %c0_i32_0 = arith.constant 0 : i32
    return %arg0, %c0_i32 : i32, i32
  }
  func.func @transform_3(%arg0: i32, %arg1: i32, %arg2: i32) -> (i32, i32) {
    %c0_i32 = arith.constant 0 : i32
    %c0_i32_0 = arith.constant 0 : i32
    %c0_i32_1 = arith.constant 0 : i32
    return %c0_i32, %c0_i32_0 : i32, i32
  }
  func.func @transform_4(%arg0: i32, %arg1: i32, %arg2: i32) -> (i32, i32) {
    %c0_i32 = arith.constant 0 : i32
    %c0_i32_0 = arith.constant 0 : i32
    %c0_i32_1 = arith.constant 0 : i32
    return %c0_i32, %c0_i32_0 : i32, i32
  }
  func.func @transform_5(%arg0: i32, %arg1: i32, %arg2: i32) -> (i32, i32) {
    %c0_i32 = arith.constant 0 : i32
    %c0_i32_0 = arith.constant 0 : i32
    %c0_i32_1 = arith.constant 0 : i32
    return %c0_i32, %c0_i32_0 : i32, i32
  }
  func.func @transform_6(%arg0: i32, %arg1: i32, %arg2: i32) -> (i32, i32) {
    %c0_i32 = arith.constant 0 : i32
    %c0_i32_0 = arith.constant 0 : i32
    %c0_i32_1 = arith.constant 0 : i32
    return %c0_i32, %c0_i32_0 : i32, i32
  }
  func.func @transform_7(%arg0: i32, %arg1: i32, %arg2: i32) -> (i32, i32) {
    %c0_i32 = arith.constant 0 : i32
    %c0_i32_0 = arith.constant 0 : i32
    %c0_i32_1 = arith.constant 0 : i32
    return %c0_i32, %c0_i32_0 : i32, i32
  }
  func.func @transform_8(%arg0: i32, %arg1: i32, %arg2: i32) -> (i32, i32) {
    %c0_i32 = arith.constant 0 : i32
    %c0_i32_0 = arith.constant 0 : i32
    return %arg0, %c0_i32 : i32, i32
  }
}

</mosaic_0001>

<llo_original>
// kernel: tpu_custom_call.1
$region0: #{tpu_custom_call.1}
  #allocation0 [shape = 'u32[]', space=smem, size = 0x4, offset = 0x4, fixed_abs, tag = 'smem constant byte address 0x4 - core index']
  #allocation1 [shape = 'u32[72,128]{1,0:T(1,128)}', space=vmem, size = 0x9000, scoped, tag = 'internal scratch']
  #allocation2 [shape = 'f32[16,128]{1,0:T(8,128)}', space=vmem, size = 0x2000, scoped, tag = 'scratch operand']
  #allocation3 [shape = 'f32[1,1]{1,0:T(1,128)S(6)}', space=smem, size = 0x200, scoped, tag = 'scoped memory for tpu_custom_call.1']
  %s0 = inlined_call_operand.hbm [shape: f32[3,16,16], index: 0, kind: input, shape index: {}]
  %s1 = inlined_call_operand.hbm [shape: f32[3,16,128], index: 1, kind: input, shape index: {}]
  %s2 = inlined_call_operand.hbm [shape: f32[16,128], index: 2, kind: input, shape index: {}]
  %s3 = inlined_call_operand.hbm [shape: f32[128,128], index: 3, kind: input, shape index: {}]
  %s4 = inlined_call_operand.vmem [shape: f32[1,128], index: 4, kind: input, shape index: {}]
  %s5 = inlined_call_operand.vmem [shape: f32[1,128], index: 5, kind: input, shape index: {}]
  %s6 = inlined_call_operand.vmem [shape: f32[1,128], index: 6, kind: input, shape index: {}]
  %s7 = inlined_call_operand.<no memory space> [shape: f32[1,1], index: 7, kind: input, shape index: {}]
  %s8 = inlined_call_operand.hbm [shape: f32[16,128], index: 8, kind: output, shape index: {}]
  %s9 = sld [smem:[#allocation0]]
  $region89: #{tpu_custom_call.1} parent=0
    _
  %s11 = ssub.s32 1, %s9
  %s12 = scalar_select 0, %s11, %s9
  %13 = sst [smem:[#allocation3]] %s7
  $region1: #{tpu_custom_call.1} parent=0
    #allocation4 [shape = 'u8[16384]{0}', space=vmem, size = 0x4000, scoped, tag = 'input window, operand 0']
    #allocation5 [shape = 's32[2]{0}', space=sflag, size = 0x8, scoped, tag = 'scoped memory for tpu_custom_call.1']
    #allocation6 [shape = 's32[2]{0}', space=sflag, size = 0x8, scoped, tag = 'scoped memory for tpu_custom_call.1']
    #allocation7 [shape = 'u8[16384]{0}', space=vmem, size = 0x4000, scoped, tag = 'input window, operand 1']
    #allocation8 [shape = 's32[2]{0}', space=sflag, size = 0x8, scoped, tag = 'scoped memory for tpu_custom_call.1']
    #allocation9 [shape = 'u8[8192]{0}', space=vmem, size = 0x2000, scoped, tag = 'input window, operand 2, single buffered']
    #allocation10 [shape = 'u8[65536]{0}', space=vmem, size = 0x10000, scoped, tag = 'input window, operand 3, single buffered']
    #allocation11 [shape = 's32[1]{0}', space=sflag, size = 0x4, scoped, tag = 'scoped memory for tpu_custom_call.1']
    #allocation12 [shape = 'u8[8192]{0}', space=vmem, size = 0x2000, scoped, tag = 'output window, operand 0, single buffered']
    %14 = vsyncpa [#allocation5], 0
    %s15 = scalar_lea.sflag [#allocation5], 1
    %16 = vsyncpa %s15, 0
    %17 = vsyncpa [#allocation8], 0
    %s18 = scalar_lea.sflag [#allocation8], 1
    %19 = vsyncpa %s18, 0
    %20 = vsyncpa [#allocation11], 0
    %21 = vsyncpa [#allocation6], 0
    loop: start=0, step=1, limit=5
    $region2: #{tpu_custom_call.1} parent=1 // loop_pre_header
      _
    $region3: #{tpu_custom_call.1} parent=1 // loop_header
      %s23 = sphi 0, %s27
      %p24 = scmp.ge.s32.totalorder %s23, 5
      %s30 = sphi 0, %s49
      %s31 = sphi 0, %s45
      %s32 = sphi 0, %s41
      %s33 = sphi 0, %s30
      %s34 = sphi 0, %s31
      %s35 = sphi 0, %s32
      %s36 = sphi 0, %s33
      %s37 = sphi 0, %s34
      %s38 = sphi 0, %s35
      %s56 = sphi 0, %s58
      %s59 = sphi 0, %s56
      %s60 = sphi 0, %s59
      %s76 = sphi 0, %s60
      %s84 = sphi 0, %s86
      %s87 = sphi 0, %s84
      %s88 = sphi 0, %s87
      %s104 = sphi 0, %s88
      %s110 = sphi 0, %s112
      %s113 = sphi 0, %s110
      %s114 = sphi 0, %s113
      %s130 = sphi 0, %s114
      %s134 = sphi 0, %s134
      %s136 = sphi 0, %s134
      %s137 = sphi 0, %s136
      %s151 = sphi 0, %s137
      %s155 = sphi 0, %s155
      %s157 = sphi 0, %s155
      %s158 = sphi 0, %s157
      %s172 = sphi 0, %s158
      %s176 = sphi 0, %s176
      %s178 = sphi 0, %s176
      %s179 = sphi 0, %s178
      %s193 = sphi 0, %s179
      %s197 = sphi 0, %s197
      %s199 = sphi 0, %s197
      %s200 = sphi 0, %s199
      %s214 = sphi 0, %s200
      %s218 = sphi 0, %s218
      %s220 = sphi 0, %s218
      %s221 = sphi 0, %s220
      %s235 = sphi 0, %s221
      %s241 = sphi 0, %s243
      %s244 = sphi 0, %s241
      %s245 = sphi 0, %s244
      %s261 = sphi 0, %s245
    $region4: #{tpu_custom_call.1} parent=1 // loop_header_branch
      %26 = sbr.rel (%p24) target = $region8
    $region5: #{tpu_custom_call.1} parent=1 // loop_body
      %s28 = ssub.s32 %s23, 1
      %s29 = ssub.s32 %s23, 2
      %s39 = sadd.s32 1, %s32
      %p40 = scmp.ge.s32.totalorder %s39, 1
      %s41 = scalar_select %p40, 0, %s39
      %s42 = sadd.s32 1, %s31
      %s43 = scalar_select %p40, %s42, %s31
      %p44 = scmp.ge.s32.totalorder %s43, 3
      %s45 = scalar_select %p44, 0, %s43
      %s46 = sadd.s32 1, %s30
      %s47 = scalar_select %p44, %s46, %s30
      %p48 = scmp.ge.s32.totalorder %s47, 1
      %s49 = scalar_select %p48, 0, %s47
      %s50 = ssub.s32 %s31, %s45
      %s51 = ssub.s32 %s30, %s49
      %s52 = sor.u32 %s50, %s51
      %s53 = ssub.s32 %s32, %s41
      %s54 = sor.u32 %s52, %s53
      %p55 = scmp.eq.s32.totalorder %s54, 0
      %s57 = sadd.s32 %s56, 1
      %s58 = scalar_select %p55, %s56, %s57
      %p61 = pneg %p55
      %p62 = scmp.eq.s32.totalorder %s23, 2
      %p63 = por %p61, %p62
      %p64 = scmp.ne.s32.totalorder %s56, %s59
      %p65 = scmp.eq.s32.totalorder %s23, 0
      %p66 = por %p64, %p65
      %p67 = scmp.ne.s32.totalorder %s56, %s59
      %p68 = scmp.eq.s32.totalorder %s28, 2
      %p69 = por %p67, %p68
      %p70 = scmp.ne.s32.totalorder %s59, %s60
      %p71 = scmp.eq.s32.totalorder %s28, 0
      %p72 = por %p70, %p71
      %p73 = scmp.ne.s32.totalorder %s59, %s60
      %p74 = scmp.eq.s32.totalorder %s29, 2
      %p75 = por %p73, %p74
      %p77 = scmp.ne.s32.totalorder %s60, %s76
      %p78 = scmp.eq.s32.totalorder %s29, 0
      %p79 = por %p77, %p78
      %s80 = ssub.s32 %s31, %s45
      %s81 = ssub.s32 %s32, %s41
      %s82 = sor.u32 %s80, %s81
      %p83 = scmp.eq.s32.totalorder %s82, 0
      %s85 = sadd.s32 %s84, 1
      %s86 = scalar_select %p83, %s84, %s85
      %p89 = pneg %p83
      %p90 = scmp.eq.s32.totalorder %s23, 2
      %p91 = por %p89, %p90
      %p92 = scmp.ne.s32.totalorder %s84, %s87
      %p93 = scmp.eq.s32.totalorder %s23, 0
      %p94 = por %p92, %p93
      %p95 = scmp.ne.s32.totalorder %s84, %s87
      %p96 = scmp.eq.s32.totalorder %s28, 2
      %p97 = por %p95, %p96
      %p98 = scmp.ne.s32.totalorder %s87, %s88
      %p99 = scmp.eq.s32.totalorder %s28, 0
      %p100 = por %p98, %p99
      %p101 = scmp.ne.s32.totalorder %s87, %s88
      %p102 = scmp.eq.s32.totalorder %s29, 2
      %p103 = por %p101, %p102
      %p105 = scmp.ne.s32.totalorder %s88, %s104
      %p106 = scmp.eq.s32.totalorder %s29, 0
      %p107 = por %p105, %p106
      %s108 = ssub.s32 %s30, %s49
      %p109 = scmp.eq.s32.totalorder %s108, 0
      %s111 = sadd.s32 %s110, 1
      %s112 = scalar_select %p109, %s110, %s111
      %p115 = pneg %p109
      %p116 = scmp.eq.s32.totalorder %s23, 2
      %p117 = por %p115, %p116
      %p118 = scmp.ne.s32.totalorder %s110, %s113
      %p119 = scmp.eq.s32.totalorder %s23, 0
      %p120 = por %p118, %p119
      %p121 = scmp.ne.s32.totalorder %s110, %s113
      %p122 = scmp.eq.s32.totalorder %s28, 2
      %p123 = por %p121, %p122
      %p124 = scmp.ne.s32.totalorder %s113, %s114
      %p125 = scmp.eq.s32.totalorder %s28, 0
      %p126 = por %p124, %p125
      %p127 = scmp.ne.s32.totalorder %s113, %s114
      %p128 = scmp.eq.s32.totalorder %s29, 2
      %p129 = por %p127, %p128
      %p131 = scmp.ne.s32.totalorder %s114, %s130
      %p132 = scmp.eq.s32.totalorder %s29, 0
      %p133 = por %p131, %p132
      %s135 = sadd.s32 %s134, 1
      %p138 = scmp.eq.s32.totalorder %s23, 2
      %p139 = scmp.ne.s32.totalorder %s134, %s136
      %p140 = scmp.eq.s32.totalorder %s23, 0
      %p141 = por %p139, %p140
      %p142 = scmp.ne.s32.totalorder %s134, %s136
      %p143 = scmp.eq.s32.totalorder %s28, 2
      %p144 = por %p142, %p143
      %p145 = scmp.ne.s32.totalorder %s136, %s137
      %p146 = scmp.eq.s32.totalorder %s28, 0
      %p147 = por %p145, %p146
      %p148 = scmp.ne.s32.totalorder %s136, %s137
      %p149 = scmp.eq.s32.totalorder %s29, 2
      %p150 = por %p148, %p149
      %p152 = scmp.ne.s32.totalorder %s137, %s151
      %p153 = scmp.eq.s32.totalorder %s29, 0
      %p154 = por %p152, %p153
      %s156 = sadd.s32 %s155, 1
      %p159 = scmp.eq.s32.totalorder %s23, 2
      %p160 = scmp.ne.s32.totalorder %s155, %s157
      %p161 = scmp.eq.s32.totalorder %s23, 0
      %p162 = por %p160, %p161
      %p163 = scmp.ne.s32.totalorder %s155, %s157
      %p164 = scmp.eq.s32.totalorder %s28, 2
      %p165 = por %p163, %p164
      %p166 = scmp.ne.s32.totalorder %s157, %s158
      %p167 = scmp.eq.s32.totalorder %s28, 0
      %p168 = por %p166, %p167
      %p169 = scmp.ne.s32.totalorder %s157, %s158
      %p170 = scmp.eq.s32.totalorder %s29, 2
      %p171 = por %p169, %p170
      %p173 = scmp.ne.s32.totalorder %s158, %s172
      %p174 = scmp.eq.s32.totalorder %s29, 0
      %p175 = por %p173, %p174
      %s177 = sadd.s32 %s176, 1
      %p180 = scmp.eq.s32.totalorder %s23, 2
      %p181 = scmp.ne.s32.totalorder %s176, %s178
      %p182 = scmp.eq.s32.totalorder %s23, 0
      %p183 = por %p181, %p182
      %p184 = scmp.ne.s32.totalorder %s176, %s178
      %p185 = scmp.eq.s32.totalorder %s28, 2
      %p186 = por %p184, %p185
      %p187 = scmp.ne.s32.totalorder %s178, %s179
      %p188 = scmp.eq.s32.totalorder %s28, 0
      %p189 = por %p187, %p188
      %p190 = scmp.ne.s32.totalorder %s178, %s179
      %p191 = scmp.eq.s32.totalorder %s29, 2
      %p192 = por %p190, %p191
      %p194 = scmp.ne.s32.totalorder %s179, %s193
      %p195 = scmp.eq.s32.totalorder %s29, 0
      %p196 = por %p194, %p195
      %s198 = sadd.s32 %s197, 1
      %p201 = scmp.eq.s32.totalorder %s23, 2
      %p202 = scmp.ne.s32.totalorder %s197, %s199
      %p203 = scmp.eq.s32.totalorder %s23, 0
      %p204 = por %p202, %p203
      %p205 = scmp.ne.s32.totalorder %s197, %s199
      %p206 = scmp.eq.s32.totalorder %s28, 2
      %p207 = por %p205, %p206
      %p208 = scmp.ne.s32.totalorder %s199, %s200
      %p209 = scmp.eq.s32.totalorder %s28, 0
      %p210 = por %p208, %p209
      %p211 = scmp.ne.s32.totalorder %s199, %s200
      %p212 = scmp.eq.s32.totalorder %s29, 2
      %p213 = por %p211, %p212
      %p215 = scmp.ne.s32.totalorder %s200, %s214
      %p216 = scmp.eq.s32.totalorder %s29, 0
      %p217 = por %p215, %p216
      %s219 = sadd.s32 %s218, 1
      %p222 = scmp.eq.s32.totalorder %s23, 2
      %p223 = scmp.ne.s32.totalorder %s218, %s220
      %p224 = scmp.eq.s32.totalorder %s23, 0
      %p225 = por %p223, %p224
      %p226 = scmp.ne.s32.totalorder %s218, %s220
      %p227 = scmp.eq.s32.totalorder %s28, 2
      %p228 = por %p226, %p227
      %p229 = scmp.ne.s32.totalorder %s220, %s221
      %p230 = scmp.eq.s32.totalorder %s28, 0
      %p231 = por %p229, %p230
      %p232 = scmp.ne.s32.totalorder %s220, %s221
      %p233 = scmp.eq.s32.totalorder %s29, 2
      %p234 = por %p232, %p233
      %p236 = scmp.ne.s32.totalorder %s221, %s235
      %p237 = scmp.eq.s32.totalorder %s29, 0
      %p238 = por %p236, %p237
      %s239 = ssub.s32 %s30, %s49
      %p240 = scmp.eq.s32.totalorder %s239, 0
      %s242 = sadd.s32 %s241, 1
      %s243 = scalar_select %p240, %s241, %s242
      %p246 = pneg %p240
      %p247 = scmp.eq.s32.totalorder %s23, 2
      %p248 = por %p246, %p247
      %p249 = scmp.ne.s32.totalorder %s241, %s244
      %p250 = scmp.eq.s32.totalorder %s23, 0
      %p251 = por %p249, %p250
      %p252 = scmp.ne.s32.totalorder %s241, %s244
      %p253 = scmp.eq.s32.totalorder %s28, 2
      %p254 = por %p252, %p253
      %p255 = scmp.ne.s32.totalorder %s244, %s245
      %p256 = scmp.eq.s32.totalorder %s28, 0
      %p257 = por %p255, %p256
      %p258 = scmp.ne.s32.totalorder %s244, %s245
      %p259 = scmp.eq.s32.totalorder %s29, 2
      %p260 = por %p258, %p259
      %p262 = scmp.ne.s32.totalorder %s245, %s261
      %p263 = scmp.eq.s32.totalorder %s29, 0
      %p264 = por %p262, %p263
      %p265 = scmp.le.s32.totalorder 1, %s23
      %p266 = scmp.lt.s32.totalorder %s23, 4
      %p267 = pnand %p265, %p266
      %p268 = pneg %p267
      // Predicated region
      $region9: #{tpu_custom_call.1} parent=5 // pred_check
        _
      $region10: #{tpu_custom_call.1} parent=5 // pred_check_branch
        %270 = sbr.rel (%p267) target = $region12
      $region11: #{tpu_custom_call.1} parent=5 // pred_region
        %s271 = ssub.s32 %s23, 1
        // Predicated region
        $region13: #{tpu_custom_call.1} parent=11 // pred_check
          %p272 = pneg %p126
        $region14: #{tpu_custom_call.1} parent=11 // pred_check_branch
          %274 = sbr.rel (%p272) target = $region16
        $region15: #{tpu_custom_call.1} parent=11 // pred_region
          %s275 = smul.u32 2, %s33
          %277 = vsyncadd [#allocation8], 0
          %s278 = smul.addr %s275, 8
          %s279 = scalar_lea.hbm %s2, %s278
          %s280 = sshll.u32 %s279, 4
          %s281 = int_to_ptr.hbm [resolvable:$true] %s280
          %s282 = sshll.u32 [#allocation9], 4
          %s283 = int_to_ptr.vmem [resolvable:$true] %s282
          %288 = dma.hbm_to_vmem [thread:$0]  %s281, 256, %s283, [#allocation8], 128, 128, 8
        $region16: #{tpu_custom_call.1} parent=11 // pred_fallthru
          _
        // Predicated region
        $region17: #{tpu_custom_call.1} parent=11 // pred_check
          %p289 = pneg %p147
        $region18: #{tpu_custom_call.1} parent=11 // pred_check_branch
          %291 = sbr.rel (%p289) target = $region20
        $region19: #{tpu_custom_call.1} parent=11 // pred_region
          %293 = vsyncadd [#allocation11], 0
          %s294 = sshll.u32 %s3, 4
          %s295 = int_to_ptr.hbm [resolvable:$true] %s294
          %s296 = sshll.u32 [#allocation10], 4
          %s297 = int_to_ptr.vmem [resolvable:$true] %s296
          %302 = dma.hbm_to_vmem [thread:$0]  %s295, 2048, %s297, [#allocation11], 128, 128, 8
        $region20: #{tpu_custom_call.1} parent=11 // pred_fallthru
          _
        // Predicated region
        $region21: #{tpu_custom_call.1} parent=11 // pred_check
          %p303 = pneg %p168
        $region22: #{tpu_custom_call.1} parent=11 // pred_check_branch
          %305 = sbr.rel (%p303) target = $region24
        $region23: #{tpu_custom_call.1} parent=11 // pred_region
          _
        $region24: #{tpu_custom_call.1} parent=11 // pred_fallthru
          _
        // Predicated region
        $region25: #{tpu_custom_call.1} parent=11 // pred_check
          %p306 = pneg %p189
        $region26: #{tpu_custom_call.1} parent=11 // pred_check_branch
          %308 = sbr.rel (%p306) target = $region28
        $region27: #{tpu_custom_call.1} parent=11 // pred_region
          _
        $region28: #{tpu_custom_call.1} parent=11 // pred_fallthru
          _
        // Predicated region
        $region29: #{tpu_custom_call.1} parent=11 // pred_check
          %p309 = pneg %p210
        $region30: #{tpu_custom_call.1} parent=11 // pred_check_branch
          %311 = sbr.rel (%p309) target = $region32
        $region31: #{tpu_custom_call.1} parent=11 // pred_region
          _
        $region32: #{tpu_custom_call.1} parent=11 // pred_fallthru
          _
        // Predicated region
        $region33: #{tpu_custom_call.1} parent=11 // pred_check
          %p312 = pneg %p231
        $region34: #{tpu_custom_call.1} parent=11 // pred_check_branch
          %314 = sbr.rel (%p312) target = $region36
        $region35: #{tpu_custom_call.1} parent=11 // pred_region
          _
        $region36: #{tpu_custom_call.1} parent=11 // pred_fallthru
          _
      $region12: #{tpu_custom_call.1} parent=5 // pred_fallthru
        _
      %p315 = scmp.lt.s32.totalorder %s23, 3
      // Predicated region
      $region37: #{tpu_custom_call.1} parent=5 // pred_check
        %p316 = pneg %p315
      $region38: #{tpu_custom_call.1} parent=5 // pred_check_branch
        %318 = sbr.rel (%p316) target = $region40
      $region39: #{tpu_custom_call.1} parent=5 // pred_region
        // Predicated region
        $region41: #{tpu_custom_call.1} parent=39 // pred_check
          %p319 = pneg %p66
        $region42: #{tpu_custom_call.1} parent=39 // pred_check_branch
          %321 = sbr.rel (%p319) target = $region44
        $region43: #{tpu_custom_call.1} parent=39 // pred_region
          %s322 = sand.u32 %s56, 1
          %s323 = scalar_lea.sflag [#allocation5], %s322
          %s324 = sand.u32 %s56, 1
          %s325 = smul.addr %s324, 16
          %s326 = scalar_lea.vmem [#allocation4], %s325
          %s327 = smul.u32 2, %s30
          %329 = vsyncadd %s323, 0
          %s330 = sadd.s32 %s32, %s327
          %s331 = smul.addr %s31, 2
          %s332 = sadd.s32 %s330, %s331
          %s333 = smul.addr %s332, 8
          %s334 = scalar_lea.hbm %s0, %s333
          %s335 = sshll.u32 %s334, 4
          %s336 = int_to_ptr.hbm [resolvable:$true] %s335
          %s337 = sshll.u32 %s326, 4
          %s338 = int_to_ptr.vmem [resolvable:$true] %s337
          %343 = dma.hbm_to_vmem [thread:$0]  %s336, 256, %s338, %s323, 128, 128, 8
        $region44: #{tpu_custom_call.1} parent=39 // pred_fallthru
          _
        // Predicated region
        $region45: #{tpu_custom_call.1} parent=39 // pred_check
          %p344 = pneg %p94
        $region46: #{tpu_custom_call.1} parent=39 // pred_check_branch
          %346 = sbr.rel (%p344) target = $region48
        $region47: #{tpu_custom_call.1} parent=39 // pred_region
          %s347 = sand.u32 %s23, 1
          %s348 = scalar_lea.sflag [#allocation8], %s347
          %s349 = sand.u32 %s84, 1
          %s350 = smul.addr %s349, 16
          %s351 = scalar_lea.vmem [#allocation7], %s350
          %s352 = smul.u32 2, %s32
          %354 = vsyncadd %s348, 0
          %s355 = smul.addr %s31, 2
          %s356 = sadd.s32 %s352, %s355
          %s357 = smul.addr %s356, 8
          %s358 = scalar_lea.hbm %s1, %s357
          %s359 = sshll.u32 %s358, 4
          %s360 = int_to_ptr.hbm [resolvable:$true] %s359
          %s361 = sshll.u32 %s351, 4
          %s362 = int_to_ptr.vmem [resolvable:$true] %s361
          %367 = dma.hbm_to_vmem [thread:$0]  %s360, 256, %s362, %s348, 128, 128, 8
        $region48: #{tpu_custom_call.1} parent=39 // pred_fallthru
          _
      $region40: #{tpu_custom_call.1} parent=5 // pred_fallthru
        _
      %p368 = scmp.le.s32.totalorder 1, %s23
      %p369 = scmp.lt.s32.totalorder %s23, 4
      %p370 = pnand %p368, %p369
      %p371 = pneg %p370
      // Predicated region
      $region49: #{tpu_custom_call.1} parent=5 // pred_check
        _
      $region50: #{tpu_custom_call.1} parent=5 // pred_check_branch
        %373 = sbr.rel (%p370) target = $region52
      $region51: #{tpu_custom_call.1} parent=5 // pred_region
        %s374 = ssub.s32 %s23, 1
        %s375 = sand.u32 %s59, 1
        %s376 = scalar_lea.sflag [#allocation5], %s375
        %s377 = sand.u32 %s59, 1
        %s378 = smul.addr %s377, 16
        %s379 = scalar_lea.vmem [#allocation4], %s378
        // Predicated region
        $region53: #{tpu_custom_call.1} parent=51 // pred_check
          %p380 = pneg %p72
        $region54: #{tpu_custom_call.1} parent=51 // pred_check_branch
          %382 = sbr.rel (%p380) target = $region56
        $region55: #{tpu_custom_call.1} parent=51 // pred_region
          %384 = dma.done %s376, 256
        $region56: #{tpu_custom_call.1} parent=51 // pred_fallthru
          _
        %s385 = sand.u32 %s28, 1
        %s386 = scalar_lea.sflag [#allocation8], %s385
        %s387 = sand.u32 %s87, 1
        %s388 = smul.addr %s387, 16
        %s389 = scalar_lea.vmem [#allocation7], %s388
        // Predicated region
        $region57: #{tpu_custom_call.1} parent=51 // pred_check
          %p390 = pneg %p100
        $region58: #{tpu_custom_call.1} parent=51 // pred_check_branch
          %392 = sbr.rel (%p390) target = $region60
        $region59: #{tpu_custom_call.1} parent=51 // pred_region
          %394 = dma.done %s386, 256
        $region60: #{tpu_custom_call.1} parent=51 // pred_fallthru
          _
        // Predicated region
        $region61: #{tpu_custom_call.1} parent=51 // pred_check
          %p395 = pneg %p126
        $region62: #{tpu_custom_call.1} parent=51 // pred_check_branch
          %397 = sbr.rel (%p395) target = $region64
        $region63: #{tpu_custom_call.1} parent=51 // pred_region
          %399 = dma.done [#allocation8], 256
        $region64: #{tpu_custom_call.1} parent=51 // pred_fallthru
          _
        // Predicated region
        $region65: #{tpu_custom_call.1} parent=51 // pred_check
          %p400 = pneg %p147
        $region66: #{tpu_custom_call.1} parent=51 // pred_check_branch
          %402 = sbr.rel (%p400) target = $region68
        $region67: #{tpu_custom_call.1} parent=51 // pred_region
          %404 = dma.done [#allocation11], 2048
        $region68: #{tpu_custom_call.1} parent=51 // pred_fallthru
          _
        %s405 = sand.u32 %s59, 1
        %s406 = scalar_lea.sflag [#allocation5], %s405
        %s407 = sand.u32 %s59, 1
        %s408 = smul.addr %s407, 16
        %s409 = scalar_lea.vmem [#allocation4], %s408
        %p410 = pneg %p72
        %p411 = pneg %p69
        %s412 = sand.u32 %s28, 1
        %s413 = scalar_lea.sflag [#allocation8], %s412
        %s414 = sand.u32 %s87, 1
        %s415 = smul.addr %s414, 16
        %s416 = scalar_lea.vmem [#allocation7], %s415
        %p417 = pneg %p100
        %p418 = pneg %p97
        %p419 = pneg %p126
        %p420 = pneg %p123
        %p421 = pneg %p147
        %p422 = pneg %p144
        %p423 = pneg %p168
        %p424 = pneg %p165
        %p425 = pneg %p189
        %p426 = pneg %p186
        %p427 = pneg %p210
        %p428 = pneg %p207
        %p429 = pneg %p231
        %p430 = pneg %p228
        %p431 = pneg %p257
        %p432 = pneg %p254
        %s433 = smul.u32 2, %s33
        %s434 = smul.u32 2, %s35
        %s435 = smul.u32 2, %s33
        %s436 = smul.u32 2, %s33
        %p437 = scmp.eq.s32.totalorder %s34, 0
        %p438 = scmp.eq.s32.totalorder %s35, 0
        %p439 = pnand %p437, %p438
        %p440 = pneg %p439
        // Predicated region
        $region69: #{tpu_custom_call.1} parent=51 // pred_check
          _
        $region70: #{tpu_custom_call.1} parent=51 // pred_check_branch
          %442 = sbr.rel (%p439) target = $region72
        $region71: #{tpu_custom_call.1} parent=51 // pred_region
          %v443 = vld [vmem:[#allocation9] sm:$0xff]
          %v444 = vld [vmem:[#allocation9 + $0x8] sm:$0xff]
          %v445 = vld [vmem:[#allocation10] sm:$0xff]
          %v446 = vld [vmem:[#allocation10 + $0x8] sm:$0xff]
          %v447 = vld [vmem:[#allocation10 + $0x10] sm:$0xff]
          %v448 = vld [vmem:[#allocation10 + $0x18] sm:$0xff]
          %v449 = vld [vmem:[#allocation10 + $0x20] sm:$0xff]
          %v450 = vld [vmem:[#allocation10 + $0x28] sm:$0xff]
          %v451 = vld [vmem:[#allocation10 + $0x30] sm:$0xff]
          %v452 = vld [vmem:[#allocation10 + $0x38] sm:$0xff]
          %v453 = vld [vmem:[#allocation10 + $0x40] sm:$0xff]
          %v454 = vld [vmem:[#allocation10 + $0x48] sm:$0xff]
          %v455 = vld [vmem:[#allocation10 + $0x50] sm:$0xff]
          %v456 = vld [vmem:[#allocation10 + $0x58] sm:$0xff]
          %v457 = vld [vmem:[#allocation10 + $0x60] sm:$0xff]
          %v458 = vld [vmem:[#allocation10 + $0x68] sm:$0xff]
          %v459 = vld [vmem:[#allocation10 + $0x70] sm:$0xff]
          %v460 = vld [vmem:[#allocation10 + $0x78] sm:$0xff]
          %v461 = vld [vmem:[%s4] sm:$0x1]
          %v463 = vperm.slane %v461, 0
          %465 = vmatpush.msra.mxu0 %v460
          %466 = vmatpush.msra.mxu0 %v459
          %467 = vmatpush.msra.mxu0 %v458
          %468 = vmatpush.msra.mxu0 %v457
          %469 = vmatpush.msra.mxu0 %v456
          %470 = vmatpush.msra.mxu0 %v455
          %471 = vmatpush.msra.mxu0 %v454
          %472 = vmatpush.msra.mxu0 %v453
          %473 = vmatpush.msra.mxu0 %v452
          %474 = vmatpush.msra.mxu0 %v451
          %475 = vmatpush.msra.mxu0 %v450
          %476 = vmatpush.msra.mxu0 %v449
          %477 = vmatpush.msra.mxu0 %v448
          %478 = vmatpush.msra.mxu0 %v447
          %479 = vmatpush.msra.mxu0 %v446
          %480 = vmatpush.msra.mxu0 %v445
          %481 = vmatmul.f32.gmra.mxu0 %v443
          %v482 = vpop.f32.mrf.mxu0
          %v483 = vadd.f32 %v463, %v482
          %484 = vmatmul.f32.gmra.mxu0 %v444
          %v485 = vpop.f32.mrf.mxu0
          %v486 = vadd.f32 %v463, %v485
          %487 = vdwg.mxu0
          %488 = vst [vmem:[#allocation2] sm:$0xff] %v483
          %489 = vst [vmem:[#allocation2 + $0x8] sm:$0xff] %v486
        $region72: #{tpu_custom_call.1} parent=51 // pred_fallthru
          _
        %v490 = vld [vmem:[#allocation2] sm:$0xff]
        %v491 = vld [vmem:[#allocation2 + $0x8] sm:$0xff]
        %v492 = vld [vmem:[%s379] sm:$0xff]
        %v493 = vld [vmem:[%s379 + $0x8] sm:$0xff]
        %v494 = vld [vmem:[%s389] sm:$0xff]
        %v495 = vld [vmem:[%s389 + $0x8] sm:$0xff]
        %vm496 = vcmask 130048
        %v498 = vsel %vm496, %v492, 0
        %v501 = vsel %vm496, %v493, 0
        %503 = vmatpush.msra.mxu0 0.0
        %504 = vmatpush.msra.mxu0 0.0
        %505 = vmatpush.msra.mxu0 0.0
        %506 = vmatpush.msra.mxu0 0.0
        %507 = vmatpush.msra.mxu0 0.0
        %508 = vmatpush.msra.mxu0 0.0
        %509 = vmatpush.msra.mxu0 0.0
        %510 = vmatpush.msra.mxu0 0.0
        %511 = vmatpush.msra.mxu0 0.0
        %512 = vmatpush.msra.mxu0 0.0
        %513 = vmatpush.msra.mxu0 0.0
        %514 = vmatpush.msra.mxu0 0.0
        %515 = vmatpush.msra.mxu0 0.0
        %516 = vmatpush.msra.mxu0 0.0
        %517 = vmatpush.msra.mxu0 %v495
        %518 = vmatpush.msra.mxu0 %v494
        %519 = vmatmul.f32.gmra.mxu0 %v498
        %v520 = vpop.f32.mrf.mxu0
        %v521 = vadd.f32 0.0, %v520
        %522 = vmatmul.f32.gmra.mxu0 %v501
        %v523 = vpop.f32.mrf.mxu0
        %v524 = vadd.f32 0.0, %v523
        %525 = vdwg.mxu0
        %v526 = vadd.f32 %v490, %v521
        %v527 = vadd.f32 %v491, %v524
        %528 = vst [vmem:[#allocation2] sm:$0xff] %v526
        %529 = vst [vmem:[#allocation2 + $0x8] sm:$0xff] %v527
        %p530 = scmp.eq.s32.totalorder %s34, 2
        %p531 = pnand %p530, %p438
        %p532 = pneg %p531
        // Predicated region
        $region73: #{tpu_custom_call.1} parent=51 // pred_check
          _
        $region74: #{tpu_custom_call.1} parent=51 // pred_check_branch
          %534 = sbr.rel (%p531) target = $region76
        $region75: #{tpu_custom_call.1} parent=51 // pred_region
          %v535 = vld [vmem:[#allocation2] sm:$0xff]
          %v536 = vld [vmem:[#allocation2 + $0x8] sm:$0xff]
          %v537 = vld [vmem:[#allocation9] sm:$0xff]
          %v538 = vld [vmem:[#allocation9 + $0x8] sm:$0xff]
          %v539 = vld [vmem:[%s5] sm:$0x1]
          %v541 = vperm.slane %v539, 0
          %v543 = vmul.f32 %v535, %v541
          %v544 = vmul.f32 %v536, %v541
          %545 = vadd.xlane.f32.xlu0 %v543
          %v546 = vpop.xlane.xlu0 %545
          %547 = vadd.xlane.f32.xlu0 %v544
          %v548 = vpop.xlane.xlu0 %547
          %v549 = vld [vmem:[%s6] sm:$0x1]
          %v551 = vperm.slane %v549, 0
          %v553 = vmul.f32 %v537, %v551
          %v554 = vmul.f32 %v538, %v551
          %555 = vadd.xlane.f32.xlu0 %v553
          %v556 = vpop.xlane.xlu0 %555
          %557 = vadd.xlane.f32.xlu0 %v554
          %v558 = vpop.xlane.xlu0 %557
          %v559 = vadd.f32 %v546, %v556
          %v560 = vadd.f32 %v548, %v558
          %s561 = sld [smem:[#allocation3]]
          %v562 = vstv %s561
          %v563 = vadd.f32 %v559, %v562
          %v564 = vadd.f32 %v560, %v562
          %v565 = vxor.u32 %v563, 2147483648
          %v566 = vxor.u32 %v564, 2147483648
          %v567 = vmul.f32 %v565, 1.442695
          %v568 = vpow.pop %v567
          %v569 = vmul.f32 %v566, 1.442695
          %v570 = vpow.pop %v569
          %v571 = vadd.f32 %v568, 1.0
          %v572 = vadd.f32 %v570, 1.0
          %v573 = vrcp.pop %v571
          %v574 = vmul.f32 %v571, %v573
          %v575 = vsub.f32 1.0, %v574
          %v576 = vmul.f32 %v573, %v575
          %v577 = vadd.f32 %v573, %v576
          %vm578 = vweird.f32 %v571
          %vm579 = vweird.f32 %v573
          %vm580 = vmor %vm578, %vm579
          %v581 = vsel %vm580, %v573, %v577
          %v582 = vand.u32 2147483647, %v571
          %vm583 = vcmp.eq.f32.partialorder %v582, 8.507059e+37
          %v584 = vand.u32 %v571, 2147483648
          %v585 = vor.u32 1.1754944e-38, %v584
          %v586 = vsel %vm583, %v585, %v581
          %v587 = vmul.f32 1.0, %v586
          %v588 = vrcp.pop %v572
          %v589 = vmul.f32 %v572, %v588
          %v590 = vsub.f32 1.0, %v589
          %v591 = vmul.f32 %v588, %v590
          %v592 = vadd.f32 %v588, %v591
          %vm593 = vweird.f32 %v572
          %vm594 = vweird.f32 %v588
          %vm595 = vmor %vm593, %vm594
          %v596 = vsel %vm595, %v588, %v592
          %v597 = vand.u32 2147483647, %v572
          %vm598 = vcmp.eq.f32.partialorder %v597, 8.507059e+37
          %v599 = vand.u32 %v572, 2147483648
          %v600 = vor.u32 1.1754944e-38, %v599
          %v601 = vsel %vm598, %v600, %v596
          %v602 = vmul.f32 1.0, %v601
          %v603 = vtanh.pop %v535
          %v604 = vtanh.pop %v536
          %v605 = vmul.f32 %v603, %v587
          %v606 = vmul.f32 %v604, %v602
          %v607 = vsub.f32 1.0, %v587
          %v608 = vsub.f32 1.0, %v602
          %v609 = vmul.f32 %v537, %v607
          %v610 = vmul.f32 %v538, %v608
          %v611 = vadd.f32 %v605, %v609
          %v612 = vadd.f32 %v606, %v610
          %613 = vst [vmem:[#allocation12] sm:$0xff] %v611
          %614 = vst [vmem:[#allocation12 + $0x8] sm:$0xff] %v612
        $region76: #{tpu_custom_call.1} parent=51 // pred_fallthru
          _
        // Predicated region
        $region77: #{tpu_custom_call.1} parent=51 // pred_check
          %p615 = pneg %p254
        $region78: #{tpu_custom_call.1} parent=51 // pred_check_branch
          %617 = sbr.rel (%p615) target = $region80
        $region79: #{tpu_custom_call.1} parent=51 // pred_region
          %s618 = smul.u32 2, %s33
          %620 = vsyncadd [#allocation6], 0
          %s621 = smul.addr %s618, 8
          %s622 = scalar_lea.hbm %s8, %s621
          %s623 = sshll.u32 [#allocation12], 4
          %s624 = int_to_ptr.vmem [resolvable:$true] %s623
          %s625 = sshll.u32 %s622, 4
          %s626 = int_to_ptr.hbm [resolvable:$true] %s625
          %631 = dma.vmem_to_hbm [thread:$0]  %s624, 256, %s626, [#allocation6], 128, 128, 8
        $region80: #{tpu_custom_call.1} parent=51 // pred_fallthru
          _
        // Predicated region
        $region81: #{tpu_custom_call.1} parent=51 // pred_check
          %p632 = pneg %p254
        $region82: #{tpu_custom_call.1} parent=51 // pred_check_branch
          %634 = sbr.rel (%p632) target = $region84
        $region83: #{tpu_custom_call.1} parent=51 // pred_region
          %636 = dma.done [#allocation6], 256
        $region84: #{tpu_custom_call.1} parent=51 // pred_fallthru
          _
      $region52: #{tpu_custom_call.1} parent=5 // pred_fallthru
        _
      %p637 = scmp.le.s32.totalorder 2, %s23
      // Predicated region
      $region85: #{tpu_custom_call.1} parent=5 // pred_check
        %p638 = pneg %p637
      $region86: #{tpu_custom_call.1} parent=5 // pred_check_branch
        %640 = sbr.rel (%p638) target = $region88
      $region87: #{tpu_custom_call.1} parent=5 // pred_region
        %s641 = ssub.s32 %s23, 2
      $region88: #{tpu_custom_call.1} parent=5 // pred_fallthru
        _
    $region6: #{tpu_custom_call.1} parent=1 // loop_footer
      %s27 = sadd.s32 1, %s23
    $region7: #{tpu_custom_call.1} parent=1 // loop_footer_branch
      %22 = sbr.rel target = $region3
    $region8: #{tpu_custom_call.1} parent=1 // loop_exit
      _
    %642 = vsyncpa [#allocation5], 1
    %s643 = scalar_lea.sflag [#allocation5], 1
    %644 = vsyncpa %s643, 1
    %645 = vsyncpa [#allocation8], 1
    %s646 = scalar_lea.sflag [#allocation8], 1
    %647 = vsyncpa %s646, 1
    %648 = vsyncpa [#allocation11], 1
    %649 = vsyncpa [#allocation6], 1
    %s650 = scalar_lea.sflag [#allocation6], 1
    %651 = vsyncpa %s650, 1

</llo_original>
